<compile_context>
chip_gen: v7x
topology: tpu7x:2x2x1
jax: 0.10.0
libtpu: 0.0.40
codegen_flags: <defaults>
</compile_context>

<pallas_src>
import jax
import jax.numpy as jnp
from jax.experimental import pallas as pl
from jax.experimental.pallas import tpu as pltpu

_LANE = 128


def _mf_kernel(wu_ref, um_ref, bias_ref, out_ref):
    # wu_ref, um_ref : (k, TB)  gathered user / movie factors, batch on lanes
    # bias_ref       : (1, TB)  precombined b[user] + c[movie]
    # out_ref        : (1, TB)  lane-dense output slab
    prod = wu_ref[...] * um_ref[...]              # VPU elementwise, (k, TB)
    dot = jnp.sum(prod, axis=0, keepdims=True)    # XLU sublane reduce -> (1, TB)
    out_ref[...] = bias_ref[...] + dot


def matrix_factorization_forward(user, movie, w, u, b, c, *, tb=1024):
    """user, movie: int32 (B,). w:(n,k) u:(m,k) b:(n,1) c:(m,1). Returns f32 (B,)."""
    B = int(user.shape[0])
    k = int(w.shape[1])
    assert tb % _LANE == 0, "batch tile must be a multiple of 128 lanes"

    # ---- embedding gathers + layout plumbing (stays in XLA) ---------------
    wuT = jnp.take(w, user, axis=0).astype(jnp.float32).T        # (k, B)
    umT = jnp.take(u, movie, axis=0).astype(jnp.float32).T       # (k, B)
    bias = (jnp.take(b[:, 0], user) + jnp.take(c[:, 0], movie))
    bias = bias.astype(jnp.float32)[None, :]                     # (1, B)

    # ---- pad batch up to a lane-aligned tile ------------------------------
    b_lane = pl.cdiv(B, _LANE) * _LANE        # B rounded up to 128 lanes
    tb_eff = tb if b_lane > tb else b_lane    # whole batch in one block if small
    Bp = pl.cdiv(B, tb_eff) * tb_eff
    if Bp != B:
        pad = ((0, 0), (0, Bp - B))
        wuT = jnp.pad(wuT, pad)
        umT = jnp.pad(umT, pad)
        bias = jnp.pad(bias, pad)

    bytes_accessed = (2 * k + 2) * Bp * 4     # two factor slabs + bias + output

    outT = pl.pallas_call(
        _mf_kernel,
        out_shape=jax.ShapeDtypeStruct((1, Bp), jnp.float32),
        grid=(Bp // tb_eff,),
        in_specs=[
            pl.BlockSpec((k, tb_eff), lambda i: (0, i)),
            pl.BlockSpec((k, tb_eff), lambda i: (0, i)),
            pl.BlockSpec((1, tb_eff), lambda i: (0, i)),
        ],
        out_specs=pl.BlockSpec((1, tb_eff), lambda i: (0, i)),
        compiler_params=pltpu.CompilerParams(
            dimension_semantics=("parallel",),
            vmem_limit_bytes=32 * 1024 * 1024,
        ),
        cost_estimate=pl.CostEstimate(
            flops=2 * Bp * k,
            transcendentals=0,
            bytes_accessed=bytes_accessed,
        ),
    )(wuT, umT, bias)

    # matches torch's pred.squeeze() on a (B, 1) prediction
    return outT[0, :B]


def init_params(key, n, m, k):
    """Deterministic init matching nn.Embedding default (N(0, 1))."""
    k1, k2, k3, k4 = jax.random.split(key, 4)
    w = jax.random.normal(k1, (n, k), dtype=jnp.float32)   # self.w
    u = jax.random.normal(k2, (m, k), dtype=jnp.float32)   # self.u
    b = jax.random.normal(k3, (n, 1), dtype=jnp.float32)   # self.b
    c = jax.random.normal(k4, (m, 1), dtype=jnp.float32)   # self.c
    return w, u, b, c


def _reference(user, movie, w, u, b, c):
    return (b[user] + c[movie]
            + jnp.sum(w[user] * u[movie], axis=1, keepdims=True)).squeeze()


if __name__ == "__main__":
    # Small synthetic shapes consistent with the module (k = 10 factors).
    n, m, k = 128, 96, 10

    key = jax.random.PRNGKey(0)
    kp, ku1, km1, ku2, km2 = jax.random.split(key, 5)
    w, u, b, c = init_params(kp, n, m, k)

    # Case 1: small ragged batch -> single lane-padded block, grid = 1.
    batch1 = 200
    user1 = jax.random.randint(ku1, (batch1,), 0, n, dtype=jnp.int32)
    movie1 = jax.random.randint(km1, (batch1,), 0, m, dtype=jnp.int32)
    pred1 = jax.block_until_ready(
        matrix_factorization_forward(user1, movie1, w, u, b, c))
    ref1 = _reference(user1, movie1, w, u, b, c)
    assert pred1.shape == (batch1,)
    assert jnp.allclose(pred1, ref1, atol=1e-5, rtol=1e-5)

    # Case 2: larger ragged batch with a multi-step grid (tile = 512 lanes).
    batch2 = 1500
    user2 = jax.random.randint(ku2, (batch2,), 0, n, dtype=jnp.int32)
    movie2 = jax.random.randint(km2, (batch2,), 0, m, dtype=jnp.int32)
    pred2 = jax.block_until_ready(
        matrix_factorization_forward(user2, movie2, w, u, b, c, tb=512))
    ref2 = _reference(user2, movie2, w, u, b, c)
    assert pred2.shape == (batch2,)
    assert jnp.allclose(pred2, ref2, atol=1e-5, rtol=1e-5)

    print("KERNEL_OK")
</pallas_src>

<mosaic_0001>
module attributes {stable_mosaic.version = 11 : i64} {
  func.func @_mf_kernel(%arg0: i32, %arg1: memref<10x256xf32, #tpu.memory_space<vmem>>, %arg2: memref<10x256xf32, #tpu.memory_space<vmem>>, %arg3: memref<1x256xf32, #tpu.memory_space<vmem>>, %arg4: memref<1x256xf32, #tpu.memory_space<vmem>>) attributes {dimension_semantics = [#tpu.dimension_semantics<parallel>], iteration_bounds = array<i64: 1>, scalar_prefetch = 0 : i64, scratch_operands = 0 : i64, tpu.core_type = #tpu.core_type<tc>, window_params = [{transform_indices = @transform_0, window_bounds = array<i64: 10, 256>}, {transform_indices = @transform_1, window_bounds = array<i64: 10, 256>}, {transform_indices = @transform_2, window_bounds = array<i64: 1, 256>}, {transform_indices = @transform_3, window_bounds = array<i64: 1, 256>}]} {
    %c0 = arith.constant 0 : index
    %c0_0 = arith.constant 0 : index
    %0 = vector.load %arg1[%c0, %c0_0] : memref<10x256xf32, #tpu.memory_space<vmem>>, vector<10x256xf32>
    %c0_1 = arith.constant 0 : index
    %c0_2 = arith.constant 0 : index
    %1 = vector.load %arg2[%c0_1, %c0_2] : memref<10x256xf32, #tpu.memory_space<vmem>>, vector<10x256xf32>
    %2 = arith.mulf %0, %1 : vector<10x256xf32>
    %cst = arith.constant dense<0.000000e+00> : vector<256xf32>
    %3 = vector.multi_reduction <add>, %2, %cst [0] : vector<10x256xf32> to vector<256xf32>
    %4 = vector.shape_cast %3 : vector<256xf32> to vector<1x256xf32>
    %c0_3 = arith.constant 0 : index
    %c0_4 = arith.constant 0 : index
    %5 = vector.load %arg3[%c0_3, %c0_4] : memref<1x256xf32, #tpu.memory_space<vmem>>, vector<1x256xf32>
    %6 = arith.addf %5, %4 : vector<1x256xf32>
    %c0_5 = arith.constant 0 : index
    %c0_6 = arith.constant 0 : index
    %7 = vector.load %arg4[%c0_5, %c0_6] : memref<1x256xf32, #tpu.memory_space<vmem>>, vector<1x256xf32>
    tpu.vector_store %arg4[%c0_5, %c0_6], %6 {strides = array<i32>} : memref<1x256xf32, #tpu.memory_space<vmem>>, vector<1x256xf32>,
    return
  }
  func.func @transform_0(%arg0: i32) -> (i32, i32) {
    %c0_i32 = arith.constant 0 : i32
    %c0_i32_0 = arith.constant 0 : i32
    return %c0_i32, %arg0 : i32, i32
  }
  func.func @transform_1(%arg0: i32) -> (i32, i32) {
    %c0_i32 = arith.constant 0 : i32
    %c0_i32_0 = arith.constant 0 : i32
    return %c0_i32, %arg0 : i32, i32
  }
  func.func @transform_2(%arg0: i32) -> (i32, i32) {
    %c0_i32 = arith.constant 0 : i32
    %c0_i32_0 = arith.constant 0 : i32
    return %c0_i32, %arg0 : i32, i32
  }
  func.func @transform_3(%arg0: i32) -> (i32, i32) {
    %c0_i32 = arith.constant 0 : i32
    %c0_i32_0 = arith.constant 0 : i32
    return %c0_i32, %arg0 : i32, i32
  }
}

</mosaic_0001>

<llo_original>
// kernel: tpu_custom_call.1
$region0: #{tpu_custom_call.1}
  #allocation0 [shape = 'u32[]', space=smem, size = 0x4, offset = 0x4, fixed_abs, tag = 'smem constant byte address 0x4 - core index']
  #allocation1 [shape = 'u32[144,128]{1,0:T(1,128)}', space=vmem, size = 0x12000, scoped, tag = 'internal scratch']
  %s0 = inlined_call_operand.hbm [shape: f32[10,256], index: 0, kind: input, shape index: {}]
  %s1 = inlined_call_operand.hbm [shape: f32[10,256], index: 1, kind: input, shape index: {}]
  %s2 = inlined_call_operand.vmem [shape: f32[1,256], index: 2, kind: input, shape index: {}]
  %s3 = inlined_call_operand.hbm [shape: f32[1,256], index: 3, kind: output, shape index: {}]
  %s4 = sld [smem:[#allocation0]]
  $region30: #{tpu_custom_call.1} parent=0
    _
  %s6 = ssub.s32 1, %s4
  %s7 = scalar_select 0, %s6, %s4
  $region1: #{tpu_custom_call.1} parent=0
    #allocation2 [shape = 'u8[16384]{0}', space=vmem, size = 0x4000, scoped, tag = 'input window, operand 0, single buffered']
    #allocation3 [shape = 's32[1]{0}', space=sflag, size = 0x4, scoped, tag = 'scoped memory for tpu_custom_call.1']
    #allocation4 [shape = 's32[1]{0}', space=sflag, size = 0x4, scoped, tag = 'scoped memory for tpu_custom_call.1']
    #allocation5 [shape = 'u8[16384]{0}', space=vmem, size = 0x4000, scoped, tag = 'input window, operand 1, single buffered']
    #allocation6 [shape = 's32[1]{0}', space=sflag, size = 0x4, scoped, tag = 'scoped memory for tpu_custom_call.1']
    #allocation7 [shape = 'u8[1024]{0}', space=vmem, size = 0x400, scoped, tag = 'output window, operand 0, single buffered']
    %8 = vsyncpa [#allocation3], 0
    %9 = vsyncpa [#allocation6], 0
    %10 = vsyncpa [#allocation4], 0
    // Predicated region
    $region2: #{tpu_custom_call.1} parent=1 // pred_check
      _
    $region3: #{tpu_custom_call.1} parent=1 // pred_check_branch
      %12 = sbr.rel (0) target = $region5
    $region4: #{tpu_custom_call.1} parent=1 // pred_region
      %s14 = ssub.s32 512, 512
      %15 = vsyncadd [#allocation3], %s14
      %s16 = sshll.u32 [#allocation2], 4
      %s17 = int_to_ptr.vmem [resolvable:$true] %s16
      %22 = dma.hbm_to_vmem [thread:$0]  %s0, 512, %s17, [#allocation3], 256, 256, 16
    $region5: #{tpu_custom_call.1} parent=1 // pred_fallthru
      _
    // Predicated region
    $region6: #{tpu_custom_call.1} parent=1 // pred_check
      _
    $region7: #{tpu_custom_call.1} parent=1 // pred_check_branch
      %24 = sbr.rel (0) target = $region9
    $region8: #{tpu_custom_call.1} parent=1 // pred_region
      %s26 = ssub.s32 512, 512
      %27 = vsyncadd [#allocation6], %s26
      %s28 = sshll.u32 [#allocation5], 4
      %s29 = int_to_ptr.vmem [resolvable:$true] %s28
      %34 = dma.hbm_to_vmem [thread:$0]  %s1, 512, %s29, [#allocation6], 256, 256, 16
    $region9: #{tpu_custom_call.1} parent=1 // pred_fallthru
      _
    // Predicated region
    $region10: #{tpu_custom_call.1} parent=1 // pred_check
      _
    $region11: #{tpu_custom_call.1} parent=1 // pred_check_branch
      %36 = sbr.rel (0) target = $region13
    $region12: #{tpu_custom_call.1} parent=1 // pred_region
      _
    $region13: #{tpu_custom_call.1} parent=1 // pred_fallthru
      _
    // Predicated region
    $region14: #{tpu_custom_call.1} parent=1 // pred_check
      _
    $region15: #{tpu_custom_call.1} parent=1 // pred_check_branch
      %38 = sbr.rel (0) target = $region17
    $region16: #{tpu_custom_call.1} parent=1 // pred_region
      %39 = dma.done [#allocation3], 512
    $region17: #{tpu_custom_call.1} parent=1 // pred_fallthru
      _
    // Predicated region
    $region18: #{tpu_custom_call.1} parent=1 // pred_check
      _
    $region19: #{tpu_custom_call.1} parent=1 // pred_check_branch
      %41 = sbr.rel (0) target = $region21
    $region20: #{tpu_custom_call.1} parent=1 // pred_region
      %42 = dma.done [#allocation6], 512
    $region21: #{tpu_custom_call.1} parent=1 // pred_fallthru
      _
    %v43 = vld [vmem:[#allocation2] sm:$0xff]
    %v44 = vld [vmem:[#allocation2 + $0x8] sm:$0xff]
    %v45 = vld [vmem:[#allocation2 + $0x10] sm:$0x3]
    %v46 = vld [vmem:[#allocation2 + $0x18] sm:$0x3]
    %v47 = vld [vmem:[#allocation5] sm:$0xff]
    %v48 = vld [vmem:[#allocation5 + $0x8] sm:$0xff]
    %v49 = vld [vmem:[#allocation5 + $0x10] sm:$0x3]
    %v50 = vld [vmem:[#allocation5 + $0x18] sm:$0x3]
    %v51 = vmul.f32 %v43, %v47
    %v52 = vmul.f32 %v44, %v48
    %v53 = vmul.f32 %v45, %v49
    %v54 = vmul.f32 %v46, %v50
    %vm55 = vcmask 1041408
    %v56 = vsel %vm55, %v53, 0.0
    %v57 = vadd.f32 %v51, %v56
    %v58 = vrot.slane %v57, 4
    %v59 = vadd.f32 %v57, %v58
    %v60 = vrot.slane %v59, 2
    %v61 = vadd.f32 %v59, %v60
    %v62 = vrot.slane %v61, 1
    %v63 = vadd.f32 %v61, %v62
    %v64 = vsel %vm55, %v54, 0.0
    %v65 = vadd.f32 %v52, %v64
    %v66 = vrot.slane %v65, 4
    %v67 = vadd.f32 %v65, %v66
    %v68 = vrot.slane %v67, 2
    %v69 = vadd.f32 %v67, %v68
    %v70 = vrot.slane %v69, 1
    %v71 = vadd.f32 %v69, %v70
    %v72 = vld [vmem:[%s2] sm:$0x3]
    %v75 = vcombine.low %v63, %v71
    %v77 = vunpack.c.l.s4 1966171168
    %v78 = vunpack.c.0.s8 %v77
    %v79 = vlaneseq
    %v80 = vshrl.u32 %v79, 7
    %v81 = vsub.s32 %v78, %v80
    %v82 = vrot.slane %v75, %v81
    %v84 = vunpack.c.l.s4 1966171168
    %v85 = vunpack.c.0.s8 %v84
    %v86 = vlaneseq
    %v87 = vshrl.u32 %v86, 7
    %v88 = vsub.s32 %v85, %v87
    %v89 = vrot.slane %v82, %v88
    %v91 = vadd.f32 %v72, %v89
    %v92 = vlaneseq
    %vm93 = vcmp.ge.s32.totalorder %v92, 0
    %vm94 = vcmp.lt.s32.totalorder %v92, 256
    %vm95 = vmand %vm93, %vm94
    %96 = vst.msk [vmem:[#allocation7] sm:$0x3] %vm95, %v91
    // Predicated region
    $region22: #{tpu_custom_call.1} parent=1 // pred_check
      _
    $region23: #{tpu_custom_call.1} parent=1 // pred_check_branch
      %98 = sbr.rel (0) target = $region25
    $region24: #{tpu_custom_call.1} parent=1 // pred_region
      %s100 = ssub.s32 32, 32
      %101 = vsyncadd [#allocation4], %s100
      %s103 = sshll.u32 [#allocation7], 4
      %s104 = int_to_ptr.vmem [resolvable:$true] %s103
      %106 = dma.vmem_to_hbm [thread:$0]  %s104, 32, %s3, [#allocation4]
    $region25: #{tpu_custom_call.1} parent=1 // pred_fallthru
      _
    // Predicated region
    $region26: #{tpu_custom_call.1} parent=1 // pred_check
      _
    $region27: #{tpu_custom_call.1} parent=1 // pred_check_branch
      %108 = sbr.rel (0) target = $region29
    $region28: #{tpu_custom_call.1} parent=1 // pred_region
      %109 = dma.done [#allocation4], 32
    $region29: #{tpu_custom_call.1} parent=1 // pred_fallthru
      _
    %110 = vsyncpa [#allocation3], 1
    %111 = vsyncpa [#allocation6], 1
    %112 = vsyncpa [#allocation4], 1

</llo_original>
